<compile_context>
chip_gen: v6e
topology: v6e:2x2x1
jax: 0.10.0
libtpu: 0.0.40
codegen_flags: <defaults>
</compile_context>

<pallas_src>
import jax
import jax.numpy as jnp
from jax.experimental import pallas as pl
from jax.experimental.pallas import tpu as pltpu


_PAD_NEG = -1e30  # pad value for logits in the fused kernel (never wins max/exp)


# ---------------------------------------------------------------------------
# Kernel 1: module semantics — gather pre-computed log-probs, masked sum.
# ---------------------------------------------------------------------------
def _lm_criterion_kernel(inp_ref, tgt_ref, msk_ref, num_ref, acc_ref):
    i = pl.program_id(1)            # row-tile index within this partition
    j = pl.program_id(2)            # vocab-tile index (innermost)
    nj = pl.num_programs(2)

    @pl.when((i == 0) & (j == 0))
    def _():
        num_ref[...] = jnp.zeros_like(num_ref)

    @pl.when(j == 0)
    def _():
        acc_ref[...] = jnp.zeros_like(acc_ref)

    x = inp_ref[...]                # (TR, TV), caller dtype (f32 or bf16)
    tgt = tgt_ref[...]              # (TR, 1) int32
    tr, tv = x.shape

    # Tile-local target id; avoids adding j*tv to a full (TR,TV) iota.
    local_tgt = tgt - j * tv
    col_ids = jax.lax.broadcasted_iota(jnp.int32, (tr, tv), 1)
    onehot = col_ids == local_tgt   # broadcast (TR,1) -> (TR,TV)

    # At most one nonzero per row -> the row-sum is exact in the input dtype;
    # only the (TR,1) column is cast to f32.
    picked = jnp.sum(jnp.where(onehot, x, jnp.zeros_like(x)),
                     axis=-1, keepdims=True).astype(jnp.float32)
    acc_ref[...] += picked

    @pl.when(j == nj - 1)
    def _():
        msk = msk_ref[...]          # (TR, 1) f32
        num_ref[...] += jnp.sum(-acc_ref[...] * msk).reshape(1, 1, 1)


# ---------------------------------------------------------------------------
# Kernel 2: fused log_softmax + criterion — reads raw logits once.
# ---------------------------------------------------------------------------
def _lm_fused_kernel(logit_ref, tgt_ref, msk_ref, num_ref, m_sc, l_sc, t_sc):
    i = pl.program_id(1)
    j = pl.program_id(2)
    nj = pl.num_programs(2)

    @pl.when((i == 0) & (j == 0))
    def _():
        num_ref[...] = jnp.zeros_like(num_ref)

    @pl.when(j == 0)
    def _():
        m_sc[...] = jnp.full_like(m_sc, -jnp.inf)
        l_sc[...] = jnp.zeros_like(l_sc)
        t_sc[...] = jnp.zeros_like(t_sc)

    x = logit_ref[...].astype(jnp.float32)     # (TR, TV)
    tgt = tgt_ref[...]                         # (TR, 1) int32
    tr, tv = x.shape

    local_tgt = tgt - j * tv
    col_ids = jax.lax.broadcasted_iota(jnp.int32, (tr, tv), 1)
    onehot = col_ids == local_tgt
    # Gather this tile's contribution to the target logit (one match per row).
    t_sc[...] += jnp.sum(jnp.where(onehot, x, 0.0), axis=-1, keepdims=True)

    # Online logsumexp across vocab tiles.
    m_new = jnp.maximum(m_sc[...], jnp.max(x, axis=-1, keepdims=True))
    l_sc[...] = l_sc[...] * jnp.exp(m_sc[...] - m_new) + jnp.sum(
        jnp.exp(x - m_new), axis=-1, keepdims=True)
    m_sc[...] = m_new

    @pl.when(j == nj - 1)
    def _():
        lse = m_sc[...] + jnp.log(l_sc[...])
        row_loss = -(t_sc[...] - lse) * msk_ref[...]     # (TR, 1)
        num_ref[...] += jnp.sum(row_loss).reshape(1, 1, 1)


# ---------------------------------------------------------------------------
# Shared launcher: padding, tiling, grid/specs, VMEM budgeting.
# ---------------------------------------------------------------------------
def _launch(kernel_fn, inp_f, tgt_f, msk_f, *, row_tile, max_vocab_tile,
            num_partitions, vocab_pad_value, num_scratch):
    N, V = inp_f.shape
    P = max(int(num_partitions), 1)

    # Shrink the row tile for small inputs; keep it a multiple of 8 sublanes.
    row_tile = max(8, min(int(row_tile), 8 * pl.cdiv(pl.cdiv(N, P), 8)))
    row_steps = pl.cdiv(N, P * row_tile)
    n_pad_rows = P * row_steps * row_tile - N
    if n_pad_rows:
        inp_f = jnp.pad(inp_f, ((0, n_pad_rows), (0, 0)),
                        constant_values=vocab_pad_value)
        tgt_f = jnp.pad(tgt_f, ((0, n_pad_rows), (0, 0)))        # index 0: valid
        msk_f = jnp.pad(msk_f, ((0, n_pad_rows), (0, 0)))        # mask 0

    # Vocab tiling: full V if small, else 128-aligned tiles (zero/neg pad cols).
    if V <= max_vocab_tile:
        vocab_tile, vocab_steps = V, 1
    else:
        vocab_tile = max(128, max_vocab_tile - (max_vocab_tile % 128))
        vocab_steps = pl.cdiv(V, vocab_tile)
        n_pad_cols = vocab_steps * vocab_tile - V
        if n_pad_cols:
            inp_f = jnp.pad(inp_f, ((0, 0), (0, n_pad_cols)),
                            constant_values=vocab_pad_value)

    grid = (P, row_steps, vocab_steps)

    # VMEM budget: double-buffered input block + small blocks/scratch + slack,
    # capped at the chip's physical VMEM (64 MiB per TC on v7x) minus headroom.
    itemsize = jnp.dtype(inp_f.dtype).itemsize
    block_bytes = row_tile * vocab_tile * itemsize
    want = 3 * block_bytes + (8 << 20)
    try:
        phys = int(pltpu.get_tpu_info().vmem_capacity_bytes)
    except Exception:  # pragma: no cover - conservative fallback (v7x size)
        phys = 64 << 20
    vmem_limit = int(min(max(want, 16 << 20), max(phys - (8 << 20), 16 << 20)))

    scratch_shapes = [pltpu.VMEM((row_tile, 1), jnp.float32)
                      for _ in range(num_scratch)]

    num_parts = pl.pallas_call(
        kernel_fn,
        out_shape=jax.ShapeDtypeStruct((P, 1, 1), jnp.float32),
        grid_spec=pltpu.PrefetchScalarGridSpec(
            num_scalar_prefetch=0,
            grid=grid,
            in_specs=[
                pl.BlockSpec((row_tile, vocab_tile),
                             lambda p, i, j: (p * row_steps + i, j)),
                # tgt/msk index maps are j-independent -> no re-DMA across j.
                pl.BlockSpec((row_tile, 1),
                             lambda p, i, j: (p * row_steps + i, 0)),
                pl.BlockSpec((row_tile, 1),
                             lambda p, i, j: (p * row_steps + i, 0)),
            ],
            out_specs=pl.BlockSpec((1, 1, 1), lambda p, i, j: (p, 0, 0)),
            scratch_shapes=scratch_shapes,
        ),
        compiler_params=pltpu.CompilerParams(
            dimension_semantics=("parallel", "arbitrary", "arbitrary"),
            vmem_limit_bytes=vmem_limit,
        ),
    )(inp_f, tgt_f, msk_f)
    return jnp.sum(num_parts)


# ---------------------------------------------------------------------------
# Public wrappers
# ---------------------------------------------------------------------------
def language_model_criterion(inp, target, mask, *, row_tile=256,
                             max_vocab_tile=8192, num_partitions=2):
    """LanguageModelCriterion.forward.

    inp: (B,S,V) log-probs (f32 or bf16 — bf16 halves HBM traffic),
    target: (B,S) int, mask: (B,S) float.  Returns scalar f32 loss.
    """
    B, S, V = inp.shape
    N = B * S
    inp_f = inp.reshape(N, V)                       # keep caller dtype
    tgt_f = target.reshape(N, 1).astype(jnp.int32)
    msk_f = mask.reshape(N, 1).astype(jnp.float32)

    num = _launch(_lm_criterion_kernel, inp_f, tgt_f, msk_f,
                  row_tile=row_tile, max_vocab_tile=max_vocab_tile,
                  num_partitions=num_partitions, vocab_pad_value=0.0,
                  num_scratch=1)
    den = jnp.sum(msk_f)
    # Guard against an all-zero mask (PyTorch would return NaN; we return 0).
    return jnp.where(den > 0, num / den, jnp.float32(0.0)).reshape(())


def language_model_criterion_from_logits(logits, target, mask, *, row_tile=256,
                                         max_vocab_tile=8192,
                                         num_partitions=2):
    """Fused log_softmax + LanguageModelCriterion.

    Equivalent to language_model_criterion(log_softmax(logits, -1), target,
    mask) but never materializes the (N, V) log-prob tensor in HBM.
    """
    B, S, V = logits.shape
    N = B * S
    inp_f = logits.reshape(N, V)
    tgt_f = target.reshape(N, 1).astype(jnp.int32)
    msk_f = mask.reshape(N, 1).astype(jnp.float32)

    num = _launch(_lm_fused_kernel, inp_f, tgt_f, msk_f,
                  row_tile=row_tile, max_vocab_tile=max_vocab_tile,
                  num_partitions=num_partitions, vocab_pad_value=_PAD_NEG,
                  num_scratch=3)
    den = jnp.sum(msk_f)
    return jnp.where(den > 0, num / den, jnp.float32(0.0)).reshape(())


# ---------------------------------------------------------------------------
# Reference + tests
# ---------------------------------------------------------------------------
def _reference(logprobs, target, mask):
    V = logprobs.shape[-1]
    flat_in = logprobs.reshape(-1, V).astype(jnp.float32)
    flat_t = target.reshape(-1)
    flat_m = mask.reshape(-1).astype(jnp.float32)
    gathered = jnp.take_along_axis(flat_in, flat_t[:, None], axis=1)[:, 0]
    return jnp.sum(-gathered * flat_m) / jnp.sum(flat_m)


if __name__ == "__main__":
    key = jax.random.PRNGKey(0)
    B, S, V = 2, 8, 32
    k1, k2, k3, k4, k5 = jax.random.split(key, 5)

    mask = (jax.random.uniform(k3, (B, S)) > 0.25).astype(jnp.float32)
    mask = mask.at[0, 0].set(1.0)   # ensure nonzero mask sum

    # --- test 1: small vocab, single vocab tile, f32 log-probs ---
    logits = jax.random.normal(k1, (B, S, V), dtype=jnp.float32)
    logprobs = jax.nn.log_softmax(logits, axis=-1)
    target = jax.random.randint(k2, (B, S), 0, V, dtype=jnp.int32)

    loss = jax.block_until_ready(language_model_criterion(logprobs, target, mask))
    ref = _reference(logprobs, target, mask)
    assert jnp.allclose(loss, ref, atol=1e-5, rtol=1e-5), (loss, ref)

    # --- test 2: vocab-tiled + column-padded path (V not 128-aligned) ---
    V2 = 300
    logits2 = jax.random.normal(k4, (B, S, V2), dtype=jnp.float32)
    logprobs2 = jax.nn.log_softmax(logits2, axis=-1)
    target2 = jax.random.randint(k5, (B, S), 0, V2, dtype=jnp.int32)

    loss2 = jax.block_until_ready(
        language_model_criterion(logprobs2, target2, mask, max_vocab_tile=128))
    ref2 = _reference(logprobs2, target2, mask)
    assert jnp.allclose(loss2, ref2, atol=1e-5, rtol=1e-5), (loss2, ref2)

    # --- test 3: bf16 log-probs (halved HBM traffic path) ---
    logprobs_bf16 = logprobs.astype(jnp.bfloat16)
    loss3 = jax.block_until_ready(
        language_model_criterion(logprobs_bf16, target, mask))
    ref3 = _reference(logprobs_bf16.astype(jnp.float32), target, mask)
    assert jnp.allclose(loss3, ref3, atol=1e-5, rtol=1e-5), (loss3, ref3)

    # --- test 4: fused log_softmax + criterion, single vocab tile ---
    loss4 = jax.block_until_ready(
        language_model_criterion_from_logits(logits, target, mask))
    assert jnp.allclose(loss4, ref, atol=1e-4, rtol=1e-4), (loss4, ref)

    # --- test 5: fused, vocab-tiled + padded path ---
    loss5 = jax.block_until_ready(
        language_model_criterion_from_logits(logits2, target2, mask,
                                             max_vocab_tile=128))
    assert jnp.allclose(loss5, ref2, atol=1e-4, rtol=1e-4), (loss5, ref2)

    print("KERNEL_OK")
</pallas_src>

<mosaic_0001>
module attributes {stable_mosaic.version = 11 : i64} {
  func.func @_lm_criterion_kernel(%arg0: i32, %arg1: i32, %arg2: i32, %arg3: memref<8x32xf32, #tpu.memory_space<vmem>>, %arg4: memref<8x1xi32, #tpu.memory_space<vmem>>, %arg5: memref<8x1xf32, #tpu.memory_space<vmem>>, %arg6: memref<1x1x1xf32, #tpu.memory_space<vmem>>, %arg7: memref<8x1xf32, #tpu.memory_space<vmem>>) attributes {dimension_semantics = [#tpu.dimension_semantics<parallel>, #tpu.dimension_semantics<arbitrary>, #tpu.dimension_semantics<arbitrary>], iteration_bounds = array<i64: 2, 1, 1>, scalar_prefetch = 0 : i64, scratch_operands = 1 : i64, tpu.core_type = #tpu.core_type<tc>, window_params = [{transform_indices = @transform_0, window_bounds = array<i64: 8, 32>}, {transform_indices = @transform_1, window_bounds = array<i64: 8, 1>}, {transform_indices = @transform_2, window_bounds = array<i64: 8, 1>}, {transform_indices = @transform_3, window_bounds = array<i64: 1, 1, 1>}]} {
    %c0_i32 = arith.constant 0 : i32
    %0 = arith.cmpi eq, %arg1, %c0_i32 : i32
    %c0_i32_0 = arith.constant 0 : i32
    %1 = arith.cmpi eq, %arg2, %c0_i32_0 : i32
    %2 = arith.andi %0, %1 : i1
    %3 = arith.extui %2 : i1 to i32
    %c0_i32_1 = arith.constant 0 : i32
    %4 = arith.cmpi ne, %3, %c0_i32_1 : i32
    scf.if %4 {
      %cst_14 = arith.constant 0.000000e+00 : f32
      %26 = vector.broadcast %cst_14 : f32 to vector<1x1x1xf32>
      %c0_15 = arith.constant 0 : index
      %c0_16 = arith.constant 0 : index
      %c0_17 = arith.constant 0 : index
      %27 = vector.load %arg6[%c0_15, %c0_16, %c0_17] : memref<1x1x1xf32, #tpu.memory_space<vmem>>, vector<1x1x1xf32>
      tpu.vector_store %arg6[%c0_15, %c0_16, %c0_17], %26 {strides = array<i32>} : memref<1x1x1xf32, #tpu.memory_space<vmem>>, vector<1x1x1xf32>,
    } else {
    }
    %c0_i32_2 = arith.constant 0 : i32
    %5 = arith.cmpi eq, %arg2, %c0_i32_2 : i32
    %6 = arith.extui %5 : i1 to i32
    %c0_i32_3 = arith.constant 0 : i32
    %7 = arith.cmpi ne, %6, %c0_i32_3 : i32
    scf.if %7 {
      %cst_14 = arith.constant 0.000000e+00 : f32
      %26 = vector.broadcast %cst_14 : f32 to vector<8x1xf32>
      %c0_15 = arith.constant 0 : index
      %c0_16 = arith.constant 0 : index
      %27 = vector.load %arg7[%c0_15, %c0_16] : memref<8x1xf32, #tpu.memory_space<vmem>>, vector<8x1xf32>
      tpu.vector_store %arg7[%c0_15, %c0_16], %26 {strides = array<i32>} : memref<8x1xf32, #tpu.memory_space<vmem>>, vector<8x1xf32>,
    } else {
    }
    %c0 = arith.constant 0 : index
    %c0_4 = arith.constant 0 : index
    %8 = vector.load %arg3[%c0, %c0_4] : memref<8x32xf32, #tpu.memory_space<vmem>>, vector<8x32xf32>
    %c0_5 = arith.constant 0 : index
    %c0_6 = arith.constant 0 : index
    %9 = vector.load %arg4[%c0_5, %c0_6] : memref<8x1xi32, #tpu.memory_space<vmem>>, vector<8x1xi32>
    %c32_i32 = arith.constant 32 : i32
    %10 = arith.muli %arg2, %c32_i32 : i32
    %11 = vector.broadcast %10 : i32 to vector<8x1xi32>
    %12 = arith.subi %9, %11 : vector<8x1xi32>
    %13 = tpu.iota {dimensions = array<i32: 1>} : vector<8x32xi32>
    %14 = vector.broadcast %12 : vector<8x1xi32> to vector<8x32xi32>
    %15 = arith.cmpi eq, %13, %14 : vector<8x32xi32>
    %cst = arith.constant 0.000000e+00 : f32
    %16 = vector.broadcast %cst : f32 to vector<8x32xf32>
    %17 = arith.select %15, %8, %16 : vector<8x32xi1>, vector<8x32xf32>
    %cst_7 = arith.constant dense<0.000000e+00> : vector<8xf32>
    %18 = vector.multi_reduction <add>, %17, %cst_7 [1] : vector<8x32xf32> to vector<8xf32>
    %19 = vector.shape_cast %18 : vector<8xf32> to vector<8x1xf32>
    %c0_8 = arith.constant 0 : index
    %c0_9 = arith.constant 0 : index
    %20 = vector.load %arg7[%c0_8, %c0_9] : memref<8x1xf32, #tpu.memory_space<vmem>>, vector<8x1xf32>
    %21 = arith.addf %20, %19 : vector<8x1xf32>
    %c0_10 = arith.constant 0 : index
    %c0_11 = arith.constant 0 : index
    %22 = vector.load %arg7[%c0_10, %c0_11] : memref<8x1xf32, #tpu.memory_space<vmem>>, vector<8x1xf32>
    tpu.vector_store %arg7[%c0_10, %c0_11], %21 {strides = array<i32>} : memref<8x1xf32, #tpu.memory_space<vmem>>, vector<8x1xf32>,
    %c0_i32_12 = arith.constant 0 : i32
    %23 = arith.cmpi eq, %arg2, %c0_i32_12 : i32
    %24 = arith.extui %23 : i1 to i32
    %c0_i32_13 = arith.constant 0 : i32
    %25 = arith.cmpi ne, %24, %c0_i32_13 : i32
    scf.if %25 {
      %c0_14 = arith.constant 0 : index
      %c0_15 = arith.constant 0 : index
      %26 = vector.load %arg5[%c0_14, %c0_15] : memref<8x1xf32, #tpu.memory_space<vmem>>, vector<8x1xf32>
      %c0_16 = arith.constant 0 : index
      %c0_17 = arith.constant 0 : index
      %c0_18 = arith.constant 0 : index
      %27 = vector.load %arg6[%c0_16, %c0_17, %c0_18] : memref<1x1x1xf32, #tpu.memory_space<vmem>>, vector<1x1x1xf32>
      %c0_19 = arith.constant 0 : index
      %c0_20 = arith.constant 0 : index
      %28 = vector.load %arg7[%c0_19, %c0_20] : memref<8x1xf32, #tpu.memory_space<vmem>>, vector<8x1xf32>
      %cst_21 = arith.constant 0.000000e+00 : f32
      %29 = vector.broadcast %cst_21 : f32 to vector<8x1xf32>
      %30 = arith.subf %29, %28 : vector<8x1xf32>
      %31 = arith.mulf %30, %26 : vector<8x1xf32>
      %32 = vector.shape_cast %31 : vector<8x1xf32> to vector<1x8x1xf32>
      %cst_22 = arith.constant dense<0.000000e+00> : vector<1xf32>
      %33 = vector.multi_reduction <add>, %32, %cst_22 [1, 2] : vector<1x8x1xf32> to vector<1xf32>
      %34 = vector.shape_cast %33 : vector<1xf32> to vector<1x1x1xf32>
      %35 = vector.extract %34[0, 0, 0] : f32 from vector<1x1x1xf32>
      %36 = vector.broadcast %35 : f32 to vector<1x1x1xf32>
      %37 = arith.addf %27, %36 : vector<1x1x1xf32>
      %c0_23 = arith.constant 0 : index
      %c0_24 = arith.constant 0 : index
      %c0_25 = arith.constant 0 : index
      %38 = vector.load %arg6[%c0_23, %c0_24, %c0_25] : memref<1x1x1xf32, #tpu.memory_space<vmem>>, vector<1x1x1xf32>
      tpu.vector_store %arg6[%c0_23, %c0_24, %c0_25], %37 {strides = array<i32>} : memref<1x1x1xf32, #tpu.memory_space<vmem>>, vector<1x1x1xf32>,
    } else {
    }
    return
  }
  func.func @transform_0(%arg0: i32, %arg1: i32, %arg2: i32) -> (i32, i32) {
    %c1_i32 = arith.constant 1 : i32
    %0 = arith.muli %arg0, %c1_i32 : i32
    %1 = arith.addi %0, %arg1 : i32
    %c0_i32 = arith.constant 0 : i32
    return %1, %arg2 : i32, i32
  }
  func.func @transform_1(%arg0: i32, %arg1: i32, %arg2: i32) -> (i32, i32) {
    %c1_i32 = arith.constant 1 : i32
    %0 = arith.muli %arg0, %c1_i32 : i32
    %1 = arith.addi %0, %arg1 : i32
    %c0_i32 = arith.constant 0 : i32
    %c0_i32_0 = arith.constant 0 : i32
    return %1, %c0_i32 : i32, i32
  }
  func.func @transform_2(%arg0: i32, %arg1: i32, %arg2: i32) -> (i32, i32) {
    %c1_i32 = arith.constant 1 : i32
    %0 = arith.muli %arg0, %c1_i32 : i32
    %1 = arith.addi %0, %arg1 : i32
    %c0_i32 = arith.constant 0 : i32
    %c0_i32_0 = arith.constant 0 : i32
    return %1, %c0_i32 : i32, i32
  }
  func.func @transform_3(%arg0: i32, %arg1: i32, %arg2: i32) -> (i32, i32, i32) {
    %c0_i32 = arith.constant 0 : i32
    %c0_i32_0 = arith.constant 0 : i32
    %c0_i32_1 = arith.constant 0 : i32
    return %arg0, %c0_i32, %c0_i32_0 : i32, i32, i32
  }
}

</mosaic_0001>

<llo_original>
// kernel: tpu_custom_call.1
$region0: #{tpu_custom_call.1}
  #allocation0 [shape = 'u32[]', space=smem, size = 0x4, offset = 0x4, fixed_abs, tag = 'smem constant byte address 0x4 - core index']
  #allocation1 [shape = 'u32[144,128]{1,0:T(1,128)}', space=vmem, size = 0x12000, scoped, tag = 'internal scratch']
  #allocation2 [shape = 'f32[8,1]{1,0:T(8,128)}', space=vmem, size = 0x1000, scoped, tag = 'scratch operand']
  %s0 = inlined_call_operand.vmem [shape: f32[16,32], index: 0, kind: input, shape index: {}]
  %s1 = inlined_call_operand.vmem [shape: s32[16,1], index: 1, kind: input, shape index: {}]
  %s2 = inlined_call_operand.vmem [shape: f32[16,1], index: 2, kind: input, shape index: {}]
  %s3 = inlined_call_operand.vmem [shape: f32[2,1,1], index: 3, kind: output, shape index: {}]
  %s4 = sld [smem:[#allocation0]]
  $region57: #{tpu_custom_call.1} parent=0
    _
  %s6 = ssub.s32 1, %s4
  %s7 = scalar_select 0, %s6, %s4
  loop: start=0, step=1, limit=4
  $region2: #{tpu_custom_call.1} parent=0 // loop_pre_header
    _
  $region3: #{tpu_custom_call.1} parent=0 // loop_header
    %s9 = sphi 0, %s13
    %p10 = scmp.ge.s32.totalorder %s9, 4
    %s16 = sphi 0, %s35
    %s17 = sphi 0, %s31
    %s18 = sphi 0, %s27
    %s19 = sphi 0, %s16
    %s20 = sphi 0, %s17
    %s21 = sphi 0, %s18
    %s22 = sphi 0, %s19
    %s23 = sphi 0, %s20
    %s24 = sphi 0, %s21
    %s42 = sphi 0, %s44
    %s45 = sphi 0, %s42
    %s46 = sphi 0, %s45
    %s62 = sphi 0, %s46
    %s70 = sphi 0, %s72
    %s73 = sphi 0, %s70
    %s74 = sphi 0, %s73
    %s90 = sphi 0, %s74
    %s98 = sphi 0, %s100
    %s101 = sphi 0, %s98
    %s102 = sphi 0, %s101
    %s118 = sphi 0, %s102
    %s124 = sphi 0, %s126
    %s127 = sphi 0, %s124
    %s128 = sphi 0, %s127
    %s144 = sphi 0, %s128
  $region4: #{tpu_custom_call.1} parent=0 // loop_header_branch
    %12 = sbr.rel (%p10) target = $region8
  $region5: #{tpu_custom_call.1} parent=0 // loop_body
    %s14 = ssub.s32 %s9, 1
    %s15 = ssub.s32 %s9, 2
    %s25 = sadd.s32 1, %s18
    %p26 = scmp.ge.s32.totalorder %s25, 1
    %s27 = scalar_select %p26, 0, %s25
    %s28 = sadd.s32 1, %s17
    %s29 = scalar_select %p26, %s28, %s17
    %p30 = scmp.ge.s32.totalorder %s29, 1
    %s31 = scalar_select %p30, 0, %s29
    %s32 = sadd.s32 1, %s16
    %s33 = scalar_select %p30, %s32, %s16
    %p34 = scmp.ge.s32.totalorder %s33, 2
    %s35 = scalar_select %p34, 0, %s33
    %s36 = sadd.s32 %s16, %s17
    %s37 = sadd.s32 %s35, %s31
    %s38 = ssub.s32 %s36, %s37
    %s39 = ssub.s32 %s18, %s27
    %s40 = sor.u32 %s38, %s39
    %p41 = scmp.eq.s32.totalorder %s40, 0
    %s43 = sadd.s32 %s42, 1
    %s44 = scalar_select %p41, %s42, %s43
    %p47 = pneg %p41
    %p48 = scmp.eq.s32.totalorder %s9, 1
    %p49 = por %p47, %p48
    %p50 = scmp.ne.s32.totalorder %s42, %s45
    %p51 = scmp.eq.s32.totalorder %s9, 0
    %p52 = por %p50, %p51
    %p53 = scmp.ne.s32.totalorder %s42, %s45
    %p54 = scmp.eq.s32.totalorder %s14, 1
    %p55 = por %p53, %p54
    %p56 = scmp.ne.s32.totalorder %s45, %s46
    %p57 = scmp.eq.s32.totalorder %s14, 0
    %p58 = por %p56, %p57
    %p59 = scmp.ne.s32.totalorder %s45, %s46
    %p60 = scmp.eq.s32.totalorder %s15, 1
    %p61 = por %p59, %p60
    %p63 = scmp.ne.s32.totalorder %s46, %s62
    %p64 = scmp.eq.s32.totalorder %s15, 0
    %p65 = por %p63, %p64
    %s66 = sadd.s32 %s16, %s17
    %s67 = sadd.s32 %s35, %s31
    %s68 = ssub.s32 %s66, %s67
    %p69 = scmp.eq.s32.totalorder %s68, 0
    %s71 = sadd.s32 %s70, 1
    %s72 = scalar_select %p69, %s70, %s71
    %p75 = pneg %p69
    %p76 = scmp.eq.s32.totalorder %s9, 1
    %p77 = por %p75, %p76
    %p78 = scmp.ne.s32.totalorder %s70, %s73
    %p79 = scmp.eq.s32.totalorder %s9, 0
    %p80 = por %p78, %p79
    %p81 = scmp.ne.s32.totalorder %s70, %s73
    %p82 = scmp.eq.s32.totalorder %s14, 1
    %p83 = por %p81, %p82
    %p84 = scmp.ne.s32.totalorder %s73, %s74
    %p85 = scmp.eq.s32.totalorder %s14, 0
    %p86 = por %p84, %p85
    %p87 = scmp.ne.s32.totalorder %s73, %s74
    %p88 = scmp.eq.s32.totalorder %s15, 1
    %p89 = por %p87, %p88
    %p91 = scmp.ne.s32.totalorder %s74, %s90
    %p92 = scmp.eq.s32.totalorder %s15, 0
    %p93 = por %p91, %p92
    %s94 = sadd.s32 %s16, %s17
    %s95 = sadd.s32 %s35, %s31
    %s96 = ssub.s32 %s94, %s95
    %p97 = scmp.eq.s32.totalorder %s96, 0
    %s99 = sadd.s32 %s98, 1
    %s100 = scalar_select %p97, %s98, %s99
    %p103 = pneg %p97
    %p104 = scmp.eq.s32.totalorder %s9, 1
    %p105 = por %p103, %p104
    %p106 = scmp.ne.s32.totalorder %s98, %s101
    %p107 = scmp.eq.s32.totalorder %s9, 0
    %p108 = por %p106, %p107
    %p109 = scmp.ne.s32.totalorder %s98, %s101
    %p110 = scmp.eq.s32.totalorder %s14, 1
    %p111 = por %p109, %p110
    %p112 = scmp.ne.s32.totalorder %s101, %s102
    %p113 = scmp.eq.s32.totalorder %s14, 0
    %p114 = por %p112, %p113
    %p115 = scmp.ne.s32.totalorder %s101, %s102
    %p116 = scmp.eq.s32.totalorder %s15, 1
    %p117 = por %p115, %p116
    %p119 = scmp.ne.s32.totalorder %s102, %s118
    %p120 = scmp.eq.s32.totalorder %s15, 0
    %p121 = por %p119, %p120
    %s122 = ssub.s32 %s16, %s35
    %p123 = scmp.eq.s32.totalorder %s122, 0
    %s125 = sadd.s32 %s124, 1
    %s126 = scalar_select %p123, %s124, %s125
    %p129 = pneg %p123
    %p130 = scmp.eq.s32.totalorder %s9, 1
    %p131 = por %p129, %p130
    %p132 = scmp.ne.s32.totalorder %s124, %s127
    %p133 = scmp.eq.s32.totalorder %s9, 0
    %p134 = por %p132, %p133
    %p135 = scmp.ne.s32.totalorder %s124, %s127
    %p136 = scmp.eq.s32.totalorder %s14, 1
    %p137 = por %p135, %p136
    %p138 = scmp.ne.s32.totalorder %s127, %s128
    %p139 = scmp.eq.s32.totalorder %s14, 0
    %p140 = por %p138, %p139
    %p141 = scmp.ne.s32.totalorder %s127, %s128
    %p142 = scmp.eq.s32.totalorder %s15, 1
    %p143 = por %p141, %p142
    %p145 = scmp.ne.s32.totalorder %s128, %s144
    %p146 = scmp.eq.s32.totalorder %s15, 0
    %p147 = por %p145, %p146
    %p148 = scmp.le.s32.totalorder 1, %s9
    %p149 = scmp.lt.s32.totalorder %s9, 3
    %p150 = pnand %p148, %p149
    %p151 = pneg %p150
    // Predicated region
    $region9: #{tpu_custom_call.1} parent=5 // pred_check
      _
    $region10: #{tpu_custom_call.1} parent=5 // pred_check_branch
      %153 = sbr.rel (%p150) target = $region12
    $region11: #{tpu_custom_call.1} parent=5 // pred_region
      %s154 = ssub.s32 %s9, 1
    $region12: #{tpu_custom_call.1} parent=5 // pred_fallthru
      _
    %p155 = scmp.lt.s32.totalorder %s9, 2
    // Predicated region
    $region13: #{tpu_custom_call.1} parent=5 // pred_check
      %p156 = pneg %p155
    $region14: #{tpu_custom_call.1} parent=5 // pred_check_branch
      %158 = sbr.rel (%p156) target = $region16
    $region15: #{tpu_custom_call.1} parent=5 // pred_region
      // Predicated region
      $region17: #{tpu_custom_call.1} parent=15 // pred_check
        %p159 = pneg %p52
      $region18: #{tpu_custom_call.1} parent=15 // pred_check_branch
        %161 = sbr.rel (%p159) target = $region20
      $region19: #{tpu_custom_call.1} parent=15 // pred_region
        %s162 = sadd.s32 %s16, %s17
        %p163 = scmp.lt.s32.totalorder %s162, 1
        %s164 = scalar_select %p163, %s162, 1
        %p165 = scmp.lt.s32.totalorder %s18, 0
        %s166 = scalar_select %p165, %s18, 0
        %s167 = sadd.s32 %s166, %s164
        %s168 = smul.addr %s167, 8
        %s169 = scalar_lea.vmem %s0, %s168
        %s170 = sadd.s32 %s16, %s17
      $region20: #{tpu_custom_call.1} parent=15 // pred_fallthru
        _
      // Predicated region
      $region21: #{tpu_custom_call.1} parent=15 // pred_check
        %p171 = pneg %p80
      $region22: #{tpu_custom_call.1} parent=15 // pred_check_branch
        %173 = sbr.rel (%p171) target = $region24
      $region23: #{tpu_custom_call.1} parent=15 // pred_region
        %s174 = sadd.s32 %s16, %s17
        %p175 = scmp.lt.s32.totalorder %s174, 1
        %s176 = scalar_select %p175, %s174, 1
        %s177 = smul.addr %s176, 8
        %s178 = scalar_lea.vmem %s1, %s177
        %s179 = sadd.s32 %s16, %s17
      $region24: #{tpu_custom_call.1} parent=15 // pred_fallthru
        _
      // Predicated region
      $region25: #{tpu_custom_call.1} parent=15 // pred_check
        %p180 = pneg %p108
      $region26: #{tpu_custom_call.1} parent=15 // pred_check_branch
        %182 = sbr.rel (%p180) target = $region28
      $region27: #{tpu_custom_call.1} parent=15 // pred_region
        %s183 = sadd.s32 %s16, %s17
        %p184 = scmp.lt.s32.totalorder %s183, 1
        %s185 = scalar_select %p184, %s183, 1
        %s186 = smul.addr %s185, 8
        %s187 = scalar_lea.vmem %s2, %s186
        %s188 = sadd.s32 %s16, %s17
      $region28: #{tpu_custom_call.1} parent=15 // pred_fallthru
        _
    $region16: #{tpu_custom_call.1} parent=5 // pred_fallthru
      _
    %p189 = scmp.le.s32.totalorder 1, %s9
    %p190 = scmp.lt.s32.totalorder %s9, 3
    %p191 = pnand %p189, %p190
    %p192 = pneg %p191
    // Predicated region
    $region29: #{tpu_custom_call.1} parent=5 // pred_check
      _
    $region30: #{tpu_custom_call.1} parent=5 // pred_check_branch
      %194 = sbr.rel (%p191) target = $region32
    $region31: #{tpu_custom_call.1} parent=5 // pred_region
      %s195 = ssub.s32 %s9, 1
      %s196 = sadd.s32 %s19, %s20
      %p197 = scmp.lt.s32.totalorder %s196, 1
      %s198 = scalar_select %p197, %s196, 1
      %p199 = scmp.lt.s32.totalorder %s21, 0
      %s200 = scalar_select %p199, %s21, 0
      %s201 = sadd.s32 %s200, %s198
      %s202 = smul.addr %s201, 8
      %s203 = scalar_lea.vmem %s0, %s202
      %p204 = pneg %p58
      %p205 = pneg %p55
      %s206 = sadd.s32 %s19, %s20
      %p207 = scmp.lt.s32.totalorder %s206, 1
      %s208 = scalar_select %p207, %s206, 1
      %s209 = smul.addr %s208, 8
      %s210 = scalar_lea.vmem %s1, %s209
      %p211 = pneg %p86
      %p212 = pneg %p83
      %s213 = sadd.s32 %s19, %s20
      %p214 = scmp.lt.s32.totalorder %s213, 1
      %s215 = scalar_select %p214, %s213, 1
      %s216 = smul.addr %s215, 8
      %s217 = scalar_lea.vmem %s2, %s216
      %p218 = pneg %p114
      %p219 = pneg %p111
      %p220 = pneg %p140
      %p221 = pneg %p137
      %p222 = scmp.lt.s32.totalorder %s19, 1
      %s223 = scalar_select %p222, %s19, 1
      %s224 = scalar_lea.vmem %s3, %s223
      %s225 = sadd.s32 %s19, %s20
      %p226 = scmp.lt.s32.totalorder %s225, 1
      %s227 = scalar_select %p226, %s225, 1
      %p228 = scmp.lt.s32.totalorder %s21, 0
      %s229 = scalar_select %p228, %s21, 0
      %s230 = sadd.s32 %s229, %s227
      %s231 = smul.addr %s230, 8
      %s232 = scalar_lea.vmem %s0, %s231
      %s233 = sadd.s32 %s19, %s20
      %s234 = sadd.s32 %s19, %s20
      %p235 = scmp.lt.s32.totalorder %s234, 1
      %s236 = scalar_select %p235, %s234, 1
      %s237 = smul.addr %s236, 8
      %s238 = scalar_lea.vmem %s1, %s237
      %s239 = sadd.s32 %s19, %s20
      %s240 = sadd.s32 %s19, %s20
      %p241 = scmp.lt.s32.totalorder %s240, 1
      %s242 = scalar_select %p241, %s240, 1
      %s243 = smul.addr %s242, 8
      %s244 = scalar_lea.vmem %s2, %s243
      %s245 = sadd.s32 %s19, %s20
      %p246 = scmp.lt.s32.totalorder %s19, 1
      %s247 = scalar_select %p246, %s19, 1
      %s248 = scalar_lea.vmem %s3, %s247
      %p249 = scmp.eq.s32.totalorder %s20, 0
      %p250 = scmp.eq.s32.totalorder %s21, 0
      %p251 = pnand %p249, %p250
      %p252 = pneg %p251
      // Predicated region
      $region33: #{tpu_custom_call.1} parent=31 // pred_check
        _
      $region34: #{tpu_custom_call.1} parent=31 // pred_check_branch
        %254 = sbr.rel (%p251) target = $region36
      $region35: #{tpu_custom_call.1} parent=31 // pred_region
        %vm255 = vcmask 0
        %256 = vst.msk [vmem:[%s248] sm:$0x1] %vm255, 0.0
      $region36: #{tpu_custom_call.1} parent=31 // pred_fallthru
        _
      // Predicated region
      $region37: #{tpu_custom_call.1} parent=31 // pred_check
        %p257 = pneg %p250
      $region38: #{tpu_custom_call.1} parent=31 // pred_check_branch
        %259 = sbr.rel (%p257) target = $region40
      $region39: #{tpu_custom_call.1} parent=31 // pred_region
        %vm260 = vcmask 7168
        %261 = vst.msk [vmem:[#allocation2] sm:$0xff] %vm260, 0.0
      $region40: #{tpu_custom_call.1} parent=31 // pred_fallthru
        _
      %v262 = vld [vmem:[%s232] sm:$0xff]
      %v263 = vld [vmem:[%s238] sm:$0xff]
      %s264 = smul.u32 %s21, 32
      %v265 = vstv %s264
      %v266 = vsub.s32 %v263, %v265
      %v267 = vlaneseq
      %v268 = vand.u32 %v267, 127
      %269 = vset.pattern.permute.xlu0 0
      %270 = vperm.xlu0 %269, %v266
      %v271 = vpop.permute.xlu0 %270
      %vm272 = vcmp.eq.s32.totalorder %v268, %v271
      %v273 = vsel %vm272, %v262, 0.0
      %vm274 = vcmask 261120
      %v275 = vsel %vm274, %v273, 0.0
      %276 = vadd.xlane.f32.xlu0 %v275
      %v277 = vpop.xlane.xlu0 %276
      %v278 = vld [vmem:[#allocation2] sm:$0xff]
      %v279 = vadd.f32 %v278, %v277
      %vm280 = vcmask 7168
      %281 = vst.msk [vmem:[#allocation2] sm:$0xff] %vm280, %v279
      // Predicated region
      $region41: #{tpu_custom_call.1} parent=31 // pred_check
        %p282 = pneg %p250
      $region42: #{tpu_custom_call.1} parent=31 // pred_check_branch
        %284 = sbr.rel (%p282) target = $region44
      $region43: #{tpu_custom_call.1} parent=31 // pred_region
        %v285 = vld [vmem:[%s244] sm:$0xff]
        %v286 = vld [vmem:[%s248] sm:$0x1]
        %v287 = vld [vmem:[#allocation2] sm:$0xff]
        %v288 = vsub.f32 0.0, %v287
        %v289 = vmul.f32 %v288, %v285
        %v290 = vsel %vm280, %v289, 0.0
        %291 = vadd.xlane.f32.xlu0 %v290
        %v292 = vpop.xlane.xlu0 %291
        %v293 = vrot.slane %v292, 4
        %v294 = vadd.f32 %v292, %v293
        %v295 = vrot.slane %v294, 2
        %v296 = vadd.f32 %v294, %v295
        %v297 = vrot.slane %v296, 1
        %v298 = vadd.f32 %v296, %v297
        %s299 = vtos %v298
        %v300 = vstv %s299
        %v301 = vadd.f32 %v286, %v300
        %vm302 = vcmask 0
        %303 = vst.msk [vmem:[%s248] sm:$0x1] %vm302, %v301
      $region44: #{tpu_custom_call.1} parent=31 // pred_fallthru
        _
      %p304 = scmp.lt.s32.totalorder %s19, 1
      %s305 = scalar_select %p304, %s19, 1
      %s306 = scalar_lea.vmem %s3, %s305
      // Predicated region
      $region45: #{tpu_custom_call.1} parent=31 // pred_check
        %p307 = pneg %p137
      $region46: #{tpu_custom_call.1} parent=31 // pred_check_branch
        %309 = sbr.rel (%p307) target = $region48
      $region47: #{tpu_custom_call.1} parent=31 // pred_region
        _
      $region48: #{tpu_custom_call.1} parent=31 // pred_fallthru
        _
    $region32: #{tpu_custom_call.1} parent=5 // pred_fallthru
      _
    %p310 = scmp.le.s32.totalorder 2, %s9
    // Predicated region
    $region49: #{tpu_custom_call.1} parent=5 // pred_check
      %p311 = pneg %p310
    $region50: #{tpu_custom_call.1} parent=5 // pred_check_branch
      %313 = sbr.rel (%p311) target = $region52
    $region51: #{tpu_custom_call.1} parent=5 // pred_region
      %s314 = ssub.s32 %s9, 2
      // Predicated region
      $region53: #{tpu_custom_call.1} parent=51 // pred_check
        %p315 = pneg %p143
      $region54: #{tpu_custom_call.1} parent=51 // pred_check_branch
        %317 = sbr.rel (%p315) target = $region56
      $region55: #{tpu_custom_call.1} parent=51 // pred_region
        %p318 = scmp.lt.s32.totalorder %s22, 1
        %s319 = scalar_select %p318, %s22, 1
        %s320 = scalar_lea.vmem %s3, %s319
      $region56: #{tpu_custom_call.1} parent=51 // pred_fallthru
        _
    $region52: #{tpu_custom_call.1} parent=5 // pred_fallthru
      _
  $region6: #{tpu_custom_call.1} parent=0 // loop_footer
    %s13 = sadd.s32 1, %s9
  $region7: #{tpu_custom_call.1} parent=0 // loop_footer_branch
    %8 = sbr.rel target = $region3
  $region8: #{tpu_custom_call.1} parent=0 // loop_exit
    _

</llo_original>
